<compile_context>
chip_gen: v7x
topology: tpu7x:2x2x1
jax: 0.10.0
libtpu: 0.0.40
codegen_flags: <defaults>
</compile_context>

<pallas_src>
import math

import jax
import jax.numpy as jnp
from jax.experimental import pallas as pl
from jax.experimental.pallas import tpu as pltpu


def _numerical_embedder_kernel(x_ref, w1_ref, b1_ref, w2_ref, b2_ref,
                               w3_ref, emb_ref, o_ref):
    # x_ref block: (tm_rows, G) f32 -- G packed token scalars per lane row.
    x = x_ref[...]

    # Linear(1, H) for all G lane slots at once: block-diagonal (G, G*H) W1
    # both expands each scalar across its 32-lane slot and applies the weight.
    h = jnp.dot(x, w1_ref[...], preferred_element_type=jnp.float32) + b1_ref[...]
    h = h * jax.nn.sigmoid(h)                                       # SiLU

    # Linear(H, H): block-diagonal (G*H, G*H) keeps tokens independent.
    h = jnp.dot(h, w2_ref[...], preferred_element_type=jnp.float32) + b2_ref[...]
    h = h * jax.nn.sigmoid(h)                                       # SiLU

    # Linear(H, H); b3 is folded into emb_ref in the wrapper.
    h = jnp.dot(h, w3_ref[...], preferred_element_type=jnp.float32)

    # Positional (feature-index) embedding + b3, pre-packed to (tm_rows, G*H).
    o_ref[...] = (h + emb_ref[...]).astype(o_ref.dtype)


def numerical_embedder(x, w1, b1, w2, b2, w3, b3, emb_table,
                       *, tokens_per_step=8192):
    """x: (B, d_numerical) f32 -> (B, d_numerical, hidden) f32."""
    B, d = x.shape
    H = emb_table.shape[1]
    M = B * d                                   # total number of tokens

    # Lane-packing factor: G tokens share one 128-lane row when H divides 128.
    G = 128 // H if (H < 128 and 128 % H == 0) else 1
    W = G * H                                   # packed lane width (128 when packed)

    # The per-step token count must be a multiple of:
    #   8*G -> packed rows per step are a multiple of 8 (sublane tile)
    #   d   -> the pre-packed embedding block repeats identically every step
    unit = (8 * G * d) // math.gcd(8 * G, d)    # lcm(8*G, d)
    units_total = -(-M // unit)
    units_per_step = max(1, min(tokens_per_step // unit, units_total))
    # v7x has two TensorCores: keep >= 2 grid programs whenever possible.
    if units_total >= 2 and units_total // units_per_step < 2:
        units_per_step = max(1, units_total // 2)

    tm_tokens = units_per_step * unit           # tokens per grid step
    tm_rows = tm_tokens // G                    # packed rows per grid step
    n_steps = -(-units_total // units_per_step)
    M_pad = n_steps * tm_tokens                 # pad to whole tiles (no partial blocks)
    rows_pad = M_pad // G
    grid = (n_steps,)

    f32 = jnp.float32

    # ---- wrapper-side repacking (done once, on device) -------------------
    x_flat = x.reshape(-1).astype(f32)
    x_flat = jnp.pad(x_flat, (0, M_pad - M))    # padded tokens are 0 -> finite math
    x_packed = x_flat.reshape(rows_pad, G)

    eye_g = jnp.eye(G, dtype=f32)
    w1_big = jnp.kron(eye_g, w1.astype(f32))    # (G, W)   block-diagonal
    w2_big = jnp.kron(eye_g, w2.astype(f32))    # (W, W)   block-diagonal
    w3_big = jnp.kron(eye_g, w3.astype(f32))    # (W, W)   block-diagonal
    b1_t = jnp.tile(b1.astype(f32), (1, G))     # (1, W)
    b2_t = jnp.tile(b2.astype(f32), (1, G))     # (1, W)

    # Fold b3 into the positional embedding, tile to one step and lane-pack.
    emb_b3 = (emb_table + b3).astype(f32)                          # (d, H)
    emb_block = jnp.tile(emb_b3, (tm_tokens // d, 1)).reshape(tm_rows, W)

    # ---- VMEM budget (double-buffered blocks + resident weights) ---------
    blk_bytes = 4 * 2 * (tm_rows * 128          # x block (lane-padded worst case)
                         + tm_rows * W          # emb block
                         + tm_rows * W)         # out block
    blk_bytes += 4 * 2 * (G * W + 2 * W * W + 2 * W)
    vmem_limit = int(min(64 * 1024 * 1024, max(32 * 1024 * 1024, 2 * blk_bytes)))

    const = lambda i: (0, 0)   # whole-parameter blocks, same for every program

    out = pl.pallas_call(
        _numerical_embedder_kernel,
        out_shape=jax.ShapeDtypeStruct((rows_pad, W), x.dtype),
        grid=grid,
        in_specs=[
            pl.BlockSpec((tm_rows, G), lambda i: (i, 0)),   # packed x tokens
            pl.BlockSpec((G, W), const),                    # W1 (block-diag)
            pl.BlockSpec((1, W), const),                    # b1 (lane-tiled)
            pl.BlockSpec((W, W), const),                    # W2 (block-diag)
            pl.BlockSpec((1, W), const),                    # b2 (lane-tiled)
            pl.BlockSpec((W, W), const),                    # W3 (block-diag)
            pl.BlockSpec((tm_rows, W), const),              # packed emb + b3
        ],
        out_specs=pl.BlockSpec((tm_rows, W), lambda i: (i, 0)),
        compiler_params=pltpu.CompilerParams(
            dimension_semantics=("parallel",),
            vmem_limit_bytes=vmem_limit),
    )(x_packed, w1_big, b1_t, w2_big, b2_t, w3_big, emb_block)

    # (rows_pad, W) is a row-major view of (M_pad, H): free metadata reshape,
    # then drop padded tokens.
    return out.reshape(M_pad, H)[:M].reshape(B, d, H)


def _reference(x, w1, b1, w2, b2, w3, b3, emb_table):
    B, d = x.shape
    xr = x.reshape(B, d, 1).astype(jnp.float32)
    h1 = jax.nn.silu(xr * w1[None] + b1[None])
    h2 = jax.nn.silu(jnp.einsum("bdh,hk->bdk", h1, w2) + b2[None])
    h3 = jnp.einsum("bdh,hk->bdk", h2, w3) + b3[None]
    return h3 + emb_table[None]


if __name__ == "__main__":
    def run_case(B, d_numerical, hidden, tokens_per_step, key):
        ks = jax.random.split(key, 8)
        # Shapes mirror the nn.Module; linear weights pre-transposed so the
        # kernel computes x @ W + b.
        x = jax.random.normal(ks[0], (B, d_numerical), dtype=jnp.float32)
        w1 = jax.random.normal(ks[1], (1, hidden), dtype=jnp.float32) * 0.5
        b1 = jax.random.normal(ks[2], (1, hidden), dtype=jnp.float32) * 0.1
        w2 = jax.random.normal(ks[3], (hidden, hidden), dtype=jnp.float32) * 0.1
        b2 = jax.random.normal(ks[4], (1, hidden), dtype=jnp.float32) * 0.1
        w3 = jax.random.normal(ks[5], (hidden, hidden), dtype=jnp.float32) * 0.1
        b3 = jax.random.normal(ks[6], (1, hidden), dtype=jnp.float32) * 0.1
        emb = jax.random.normal(ks[7], (d_numerical, hidden), dtype=jnp.float32)

        ref = _reference(x, w1, b1, w2, b2, w3, b3, emb)
        out = jax.block_until_ready(
            numerical_embedder(x, w1, b1, w2, b2, w3, b3, emb,
                               tokens_per_step=tokens_per_step))
        assert out.shape == (B, d_numerical, hidden), out.shape
        err = jnp.max(jnp.abs(out - ref))
        assert jnp.allclose(out, ref, atol=1e-5, rtol=1e-5), f"max abs err {err}"

    key = jax.random.PRNGKey(0)
    k1, k2, k3 = jax.random.split(key, 3)

    # Module-spec small shapes: batch=2, d_numerical=8, hidden=32 (one step).
    run_case(2, 8, 32, 8192, k1)
    # Multi-step grid with a non-power-of-two feature count (emb alignment).
    run_case(64, 24, 32, 256, k2)
    # Token count not a multiple of the packing unit (exercise padding path).
    run_case(7, 5, 32, 8192, k3)

    print("KERNEL_OK")
</pallas_src>

<mosaic_0001>
module attributes {stable_mosaic.version = 11 : i64} {
  func.func @_numerical_embedder_kernel(%arg0: i32, %arg1: memref<8x4xf32, #tpu.memory_space<vmem>>, %arg2: memref<4x128xf32, #tpu.memory_space<vmem>>, %arg3: memref<1x128xf32, #tpu.memory_space<vmem>>, %arg4: memref<128x128xf32, #tpu.memory_space<vmem>>, %arg5: memref<1x128xf32, #tpu.memory_space<vmem>>, %arg6: memref<128x128xf32, #tpu.memory_space<vmem>>, %arg7: memref<8x128xf32, #tpu.memory_space<vmem>>, %arg8: memref<8x128xf32, #tpu.memory_space<vmem>>) attributes {dimension_semantics = [#tpu.dimension_semantics<parallel>], iteration_bounds = array<i64: 1>, scalar_prefetch = 0 : i64, scratch_operands = 0 : i64, tpu.core_type = #tpu.core_type<tc>, window_params = [{transform_indices = @transform_0, window_bounds = array<i64: 8, 4>}, {pipeline_mode = #tpu.pipeline_mode<synchronous>, transform_indices = @transform_1, window_bounds = array<i64: 4, 128>}, {pipeline_mode = #tpu.pipeline_mode<synchronous>, transform_indices = @transform_2, window_bounds = array<i64: 1, 128>}, {pipeline_mode = #tpu.pipeline_mode<synchronous>, transform_indices = @transform_3, window_bounds = array<i64: 128, 128>}, {pipeline_mode = #tpu.pipeline_mode<synchronous>, transform_indices = @transform_4, window_bounds = array<i64: 1, 128>}, {pipeline_mode = #tpu.pipeline_mode<synchronous>, transform_indices = @transform_5, window_bounds = array<i64: 128, 128>}, {pipeline_mode = #tpu.pipeline_mode<synchronous>, transform_indices = @transform_6, window_bounds = array<i64: 8, 128>}, {transform_indices = @transform_7, window_bounds = array<i64: 8, 128>}]} {
    %c0 = arith.constant 0 : index
    %c0_0 = arith.constant 0 : index
    %0 = vector.load %arg1[%c0, %c0_0] : memref<8x4xf32, #tpu.memory_space<vmem>>, vector<8x4xf32>
    %c0_1 = arith.constant 0 : index
    %c0_2 = arith.constant 0 : index
    %1 = vector.load %arg2[%c0_1, %c0_2] : memref<4x128xf32, #tpu.memory_space<vmem>>, vector<4x128xf32>
    %cst = arith.constant dense<0.000000e+00> : vector<8x128xf32>
    %2 = tpu.matmul %0, %1, %cst {dimension_numbers = #tpu.dot_dimension_numbers<[1], [0], [0], [1], [0, 0, 1, 1], [], []>} : vector<8x4xf32>, vector<4x128xf32>, vector<8x128xf32> -> vector<8x128xf32>
    %c0_3 = arith.constant 0 : index
    %c0_4 = arith.constant 0 : index
    %3 = vector.load %arg3[%c0_3, %c0_4] : memref<1x128xf32, #tpu.memory_space<vmem>>, vector<1x128xf32>
    %4 = vector.broadcast %3 : vector<1x128xf32> to vector<8x128xf32>
    %5 = arith.addf %2, %4 : vector<8x128xf32>
    %6 = arith.negf %5 : vector<8x128xf32>
    %7 = math.exp %6 : vector<8x128xf32>
    %cst_5 = arith.constant 1.000000e+00 : f32
    %8 = vector.broadcast %cst_5 : f32 to vector<8x128xf32>
    %9 = arith.addf %8, %7 : vector<8x128xf32>
    %10 = arith.divf %8, %9 : vector<8x128xf32>
    %11 = arith.mulf %5, %10 : vector<8x128xf32>
    %c0_6 = arith.constant 0 : index
    %c0_7 = arith.constant 0 : index
    %12 = vector.load %arg4[%c0_6, %c0_7] : memref<128x128xf32, #tpu.memory_space<vmem>>, vector<128x128xf32>
    %cst_8 = arith.constant dense<0.000000e+00> : vector<8x128xf32>
    %13 = tpu.matmul %11, %12, %cst_8 {dimension_numbers = #tpu.dot_dimension_numbers<[1], [0], [0], [1], [0, 0, 1, 1], [], []>} : vector<8x128xf32>, vector<128x128xf32>, vector<8x128xf32> -> vector<8x128xf32>
    %c0_9 = arith.constant 0 : index
    %c0_10 = arith.constant 0 : index
    %14 = vector.load %arg5[%c0_9, %c0_10] : memref<1x128xf32, #tpu.memory_space<vmem>>, vector<1x128xf32>
    %15 = vector.broadcast %14 : vector<1x128xf32> to vector<8x128xf32>
    %16 = arith.addf %13, %15 : vector<8x128xf32>
    %17 = arith.negf %16 : vector<8x128xf32>
    %18 = math.exp %17 : vector<8x128xf32>
    %cst_11 = arith.constant 1.000000e+00 : f32
    %19 = vector.broadcast %cst_11 : f32 to vector<8x128xf32>
    %20 = arith.addf %19, %18 : vector<8x128xf32>
    %21 = arith.divf %19, %20 : vector<8x128xf32>
    %22 = arith.mulf %16, %21 : vector<8x128xf32>
    %c0_12 = arith.constant 0 : index
    %c0_13 = arith.constant 0 : index
    %23 = vector.load %arg6[%c0_12, %c0_13] : memref<128x128xf32, #tpu.memory_space<vmem>>, vector<128x128xf32>
    %cst_14 = arith.constant dense<0.000000e+00> : vector<8x128xf32>
    %24 = tpu.matmul %22, %23, %cst_14 {dimension_numbers = #tpu.dot_dimension_numbers<[1], [0], [0], [1], [0, 0, 1, 1], [], []>} : vector<8x128xf32>, vector<128x128xf32>, vector<8x128xf32> -> vector<8x128xf32>
    %c0_15 = arith.constant 0 : index
    %c0_16 = arith.constant 0 : index
    %25 = vector.load %arg7[%c0_15, %c0_16] : memref<8x128xf32, #tpu.memory_space<vmem>>, vector<8x128xf32>
    %26 = arith.addf %24, %25 : vector<8x128xf32>
    %c0_17 = arith.constant 0 : index
    %c0_18 = arith.constant 0 : index
    %27 = vector.load %arg8[%c0_17, %c0_18] : memref<8x128xf32, #tpu.memory_space<vmem>>, vector<8x128xf32>
    tpu.vector_store %arg8[%c0_17, %c0_18], %26 {strides = array<i32>} : memref<8x128xf32, #tpu.memory_space<vmem>>, vector<8x128xf32>,
    return
  }
  func.func @transform_0(%arg0: i32) -> (i32, i32) {
    %c0_i32 = arith.constant 0 : i32
    %c0_i32_0 = arith.constant 0 : i32
    return %arg0, %c0_i32 : i32, i32
  }
  func.func @transform_1(%arg0: i32) -> (i32, i32) {
    %c0_i32 = arith.constant 0 : i32
    %c0_i32_0 = arith.constant 0 : i32
    %c0_i32_1 = arith.constant 0 : i32
    return %c0_i32, %c0_i32_0 : i32, i32
  }
  func.func @transform_2(%arg0: i32) -> (i32, i32) {
    %c0_i32 = arith.constant 0 : i32
    %c0_i32_0 = arith.constant 0 : i32
    %c0_i32_1 = arith.constant 0 : i32
    return %c0_i32, %c0_i32_0 : i32, i32
  }
  func.func @transform_3(%arg0: i32) -> (i32, i32) {
    %c0_i32 = arith.constant 0 : i32
    %c0_i32_0 = arith.constant 0 : i32
    %c0_i32_1 = arith.constant 0 : i32
    return %c0_i32, %c0_i32_0 : i32, i32
  }
  func.func @transform_4(%arg0: i32) -> (i32, i32) {
    %c0_i32 = arith.constant 0 : i32
    %c0_i32_0 = arith.constant 0 : i32
    %c0_i32_1 = arith.constant 0 : i32
    return %c0_i32, %c0_i32_0 : i32, i32
  }
  func.func @transform_5(%arg0: i32) -> (i32, i32) {
    %c0_i32 = arith.constant 0 : i32
    %c0_i32_0 = arith.constant 0 : i32
    %c0_i32_1 = arith.constant 0 : i32
    return %c0_i32, %c0_i32_0 : i32, i32
  }
  func.func @transform_6(%arg0: i32) -> (i32, i32) {
    %c0_i32 = arith.constant 0 : i32
    %c0_i32_0 = arith.constant 0 : i32
    %c0_i32_1 = arith.constant 0 : i32
    return %c0_i32, %c0_i32_0 : i32, i32
  }
  func.func @transform_7(%arg0: i32) -> (i32, i32) {
    %c0_i32 = arith.constant 0 : i32
    %c0_i32_0 = arith.constant 0 : i32
    return %arg0, %c0_i32 : i32, i32
  }
}

</mosaic_0001>

<llo_original>
// kernel: tpu_custom_call.1
$region0: #{tpu_custom_call.1}
  #allocation0 [shape = 'u32[]', space=smem, size = 0x4, offset = 0x4, fixed_abs, tag = 'smem constant byte address 0x4 - core index']
  #allocation1 [shape = 'u32[144,128]{1,0:T(1,128)}', space=vmem, size = 0x12000, scoped, tag = 'internal scratch']
  %s0 = inlined_call_operand.vmem [shape: f32[8,4], index: 0, kind: input, shape index: {}]
  %s1 = inlined_call_operand.vmem [shape: f32[4,128], index: 1, kind: input, shape index: {}]
  %s2 = inlined_call_operand.vmem [shape: f32[1,128], index: 2, kind: input, shape index: {}]
  %s3 = inlined_call_operand.hbm [shape: f32[128,128], index: 3, kind: input, shape index: {}]
  %s4 = inlined_call_operand.vmem [shape: f32[1,128], index: 4, kind: input, shape index: {}]
  %s5 = inlined_call_operand.hbm [shape: f32[128,128], index: 5, kind: input, shape index: {}]
  %s6 = inlined_call_operand.vmem [shape: f32[8,128], index: 6, kind: input, shape index: {}]
  %s7 = inlined_call_operand.hbm [shape: f32[8,128], index: 7, kind: output, shape index: {}]
  %s8 = sld [smem:[#allocation0]]
  $region46: #{tpu_custom_call.1} parent=0
    _
  %s10 = ssub.s32 1, %s8
  %s11 = scalar_select 0, %s10, %s8
  $region1: #{tpu_custom_call.1} parent=0
    #allocation2 [shape = 'u8[65536]{0}', space=vmem, size = 0x10000, scoped, tag = 'input window, operand 3, single buffered']
    #allocation3 [shape = 's32[1]{0}', space=sflag, size = 0x4, scoped, tag = 'scoped memory for tpu_custom_call.1']
    #allocation4 [shape = 's32[1]{0}', space=sflag, size = 0x4, scoped, tag = 'scoped memory for tpu_custom_call.1']
    #allocation5 [shape = 'u8[65536]{0}', space=vmem, size = 0x10000, scoped, tag = 'input window, operand 5, single buffered']
    #allocation6 [shape = 's32[1]{0}', space=sflag, size = 0x4, scoped, tag = 'scoped memory for tpu_custom_call.1']
    #allocation7 [shape = 'u8[4096]{0}', space=vmem, size = 0x1000, scoped, tag = 'output window, operand 0, single buffered']
    %12 = vsyncpa [#allocation3], 0
    %13 = vsyncpa [#allocation6], 0
    %14 = vsyncpa [#allocation4], 0
    // Predicated region
    $region2: #{tpu_custom_call.1} parent=1 // pred_check
      _
    $region3: #{tpu_custom_call.1} parent=1 // pred_check_branch
      %16 = sbr.rel (0) target = $region5
    $region4: #{tpu_custom_call.1} parent=1 // pred_region
      _
    $region5: #{tpu_custom_call.1} parent=1 // pred_fallthru
      _
    // Predicated region
    $region6: #{tpu_custom_call.1} parent=1 // pred_check
      _
    $region7: #{tpu_custom_call.1} parent=1 // pred_check_branch
      %18 = sbr.rel (0) target = $region9
    $region8: #{tpu_custom_call.1} parent=1 // pred_region
      _
    $region9: #{tpu_custom_call.1} parent=1 // pred_fallthru
      _
    // Predicated region
    $region10: #{tpu_custom_call.1} parent=1 // pred_check
      _
    $region11: #{tpu_custom_call.1} parent=1 // pred_check_branch
      %20 = sbr.rel (0) target = $region13
    $region12: #{tpu_custom_call.1} parent=1 // pred_region
      _
    $region13: #{tpu_custom_call.1} parent=1 // pred_fallthru
      _
    // Predicated region
    $region14: #{tpu_custom_call.1} parent=1 // pred_check
      _
    $region15: #{tpu_custom_call.1} parent=1 // pred_check_branch
      %22 = sbr.rel (0) target = $region17
    $region16: #{tpu_custom_call.1} parent=1 // pred_region
      %s24 = ssub.s32 2048, 2048
      %25 = vsyncadd [#allocation3], %s24
      %s26 = sshll.u32 [#allocation2], 4
      %s27 = int_to_ptr.vmem [resolvable:$true] %s26
      %32 = dma.hbm_to_vmem [thread:$0]  %s3, 2048, %s27, [#allocation3], 128, 128, 8
    $region17: #{tpu_custom_call.1} parent=1 // pred_fallthru
      _
    // Predicated region
    $region18: #{tpu_custom_call.1} parent=1 // pred_check
      _
    $region19: #{tpu_custom_call.1} parent=1 // pred_check_branch
      %34 = sbr.rel (0) target = $region21
    $region20: #{tpu_custom_call.1} parent=1 // pred_region
      _
    $region21: #{tpu_custom_call.1} parent=1 // pred_fallthru
      _
    // Predicated region
    $region22: #{tpu_custom_call.1} parent=1 // pred_check
      _
    $region23: #{tpu_custom_call.1} parent=1 // pred_check_branch
      %36 = sbr.rel (0) target = $region25
    $region24: #{tpu_custom_call.1} parent=1 // pred_region
      %s38 = ssub.s32 2048, 2048
      %39 = vsyncadd [#allocation6], %s38
      %s40 = sshll.u32 [#allocation5], 4
      %s41 = int_to_ptr.vmem [resolvable:$true] %s40
      %46 = dma.hbm_to_vmem [thread:$0]  %s5, 2048, %s41, [#allocation6], 128, 128, 8
    $region25: #{tpu_custom_call.1} parent=1 // pred_fallthru
      _
    // Predicated region
    $region26: #{tpu_custom_call.1} parent=1 // pred_check
      _
    $region27: #{tpu_custom_call.1} parent=1 // pred_check_branch
      %48 = sbr.rel (0) target = $region29
    $region28: #{tpu_custom_call.1} parent=1 // pred_region
      _
    $region29: #{tpu_custom_call.1} parent=1 // pred_fallthru
      _
    // Predicated region
    $region30: #{tpu_custom_call.1} parent=1 // pred_check
      _
    $region31: #{tpu_custom_call.1} parent=1 // pred_check_branch
      %50 = sbr.rel (0) target = $region33
    $region32: #{tpu_custom_call.1} parent=1 // pred_region
      %51 = dma.done [#allocation3], 2048
    $region33: #{tpu_custom_call.1} parent=1 // pred_fallthru
      _
    // Predicated region
    $region34: #{tpu_custom_call.1} parent=1 // pred_check
      _
    $region35: #{tpu_custom_call.1} parent=1 // pred_check_branch
      %53 = sbr.rel (0) target = $region37
    $region36: #{tpu_custom_call.1} parent=1 // pred_region
      %54 = dma.done [#allocation6], 2048
    $region37: #{tpu_custom_call.1} parent=1 // pred_fallthru
      _
    %v55 = vld [vmem:[%s0] sm:$0xff]
    %v56 = vld [vmem:[%s1] sm:$0xf]
    %v57 = vld [vmem:[%s2] sm:$0x1]
    %v59 = vlaneseq
    %v60 = vshrl.u32 %v59, 7
    %v61 = vsub.s32 0, %v60
    %v62 = vrot.slane %v57, %v61
    %vm64 = vcmask 31744
    %v66 = vsel %vm64, %v55, 0
    %vm68 = vcmask 1043456
    %v70 = vsel %vm68, %v56, 0
    %72 = vmatprep.subr.mxu0 0.0
    %73 = vmatpush1.msra.mxu0 %v70
    %74 = vmatprep.subr.mxu0 0.0
    %75 = vmatpush1.msra.mxu0 0.0
    %76 = vmatprep.subr.mxu0 0.0
    %77 = vmatpush1.msra.mxu0 0.0
    %78 = vmatprep.subr.mxu0 0.0
    %79 = vmatpush1.msra.mxu0 0.0
    %80 = vmatprep.subr.mxu0 0.0
    %81 = vmatpush1.msra.mxu0 0.0
    %82 = vmatprep.subr.mxu0 0.0
    %83 = vmatpush1.msra.mxu0 0.0
    %84 = vmatprep.subr.mxu0 0.0
    %85 = vmatpush1.msra.mxu0 0.0
    %86 = vmatprep.subr.mxu0 0.0
    %87 = vmatpush1.msra.mxu0 0.0
    %88 = vmatprep.subr.mxu0 0.0
    %89 = vmatpush1.msra.mxu0 0.0
    %90 = vmatprep.subr.mxu0 0.0
    %91 = vmatpush1.msra.mxu0 0.0
    %92 = vmatprep.subr.mxu0 0.0
    %93 = vmatpush1.msra.mxu0 0.0
    %94 = vmatprep.subr.mxu0 0.0
    %95 = vmatpush1.msra.mxu0 0.0
    %96 = vmatprep.subr.mxu0 0.0
    %97 = vmatpush1.msra.mxu0 0.0
    %98 = vmatprep.subr.mxu0 0.0
    %99 = vmatpush1.msra.mxu0 0.0
    %100 = vmatprep.subr.mxu0 0.0
    %101 = vmatpush1.msra.mxu0 0.0
    %102 = vmatprep.subr.mxu0 0.0
    %103 = vmatpush1.msra.mxu0 0.0
    %104 = vmatprep.subr.mxu0 0.0
    %105 = vmatpush1.msra.mxu0 0.0
    %106 = vmatprep.subr.mxu0 0.0
    %107 = vmatpush1.msra.mxu0 0.0
    %108 = vmatprep.subr.mxu0 0.0
    %109 = vmatpush1.msra.mxu0 0.0
    %110 = vmatprep.subr.mxu0 0.0
    %111 = vmatpush1.msra.mxu0 0.0
    %112 = vmatprep.subr.mxu0 0.0
    %113 = vmatpush1.msra.mxu0 0.0
    %114 = vmatprep.subr.mxu0 0.0
    %115 = vmatpush1.msra.mxu0 0.0
    %116 = vmatprep.subr.mxu0 0.0
    %117 = vmatpush1.msra.mxu0 0.0
    %118 = vmatprep.subr.mxu0 0.0
    %119 = vmatpush1.msra.mxu0 0.0
    %120 = vmatprep.subr.mxu0 0.0
    %121 = vmatpush1.msra.mxu0 0.0
    %122 = vmatprep.subr.mxu0 0.0
    %123 = vmatpush1.msra.mxu0 0.0
    %124 = vmatprep.subr.mxu0 0.0
    %125 = vmatpush1.msra.mxu0 0.0
    %126 = vmatprep.subr.mxu0 0.0
    %127 = vmatpush1.msra.mxu0 0.0
    %128 = vmatprep.subr.mxu0 0.0
    %129 = vmatpush1.msra.mxu0 0.0
    %130 = vmatprep.subr.mxu0 0.0
    %131 = vmatpush1.msra.mxu0 0.0
    %132 = vmatprep.subr.mxu0 0.0
    %133 = vmatpush1.msra.mxu0 0.0
    %134 = vmatprep.subr.mxu0 0.0
    %135 = vmatpush1.msra.mxu0 0.0
    %136 = vmatprep.mubr.f32.mxu0 0.0
    %137 = vmatmul.mubr.f32.gmra.mrb[0].mxu0 %v66
    %v138 = vpop.f32.mrb[0].mxu0
    %v139 = vadd.f32 %v62, %v138
    %v140 = vpop.f32.mrb[0].mxu0
    %141 = vdwg.mxu0
    %v142 = vxor.u32 %v139, 2147483648
    %v143 = vmul.f32 %v142, 1.442695
    %v144 = vpow.pop %v143
    %v145 = vadd.f32 %v144, 1.0
    %v146 = vrcp.pop %v145
    %v147 = vmul.f32 1.0, %v146
    %v148 = vmul.f32 %v139, %v147
    %v149 = vld [vmem:[#allocation2] sm:$0xff]
    %v150 = vld [vmem:[#allocation2 + $0x8] sm:$0xff]
    %v151 = vld [vmem:[#allocation2 + $0x10] sm:$0xff]
    %v152 = vld [vmem:[#allocation2 + $0x18] sm:$0xff]
    %v153 = vld [vmem:[#allocation2 + $0x20] sm:$0xff]
    %v154 = vld [vmem:[#allocation2 + $0x28] sm:$0xff]
    %v155 = vld [vmem:[#allocation2 + $0x30] sm:$0xff]
    %v156 = vld [vmem:[#allocation2 + $0x38] sm:$0xff]
    %v157 = vld [vmem:[#allocation2 + $0x40] sm:$0xff]
    %v158 = vld [vmem:[#allocation2 + $0x48] sm:$0xff]
    %v159 = vld [vmem:[#allocation2 + $0x50] sm:$0xff]
    %v160 = vld [vmem:[#allocation2 + $0x58] sm:$0xff]
    %v161 = vld [vmem:[#allocation2 + $0x60] sm:$0xff]
    %v162 = vld [vmem:[#allocation2 + $0x68] sm:$0xff]
    %v163 = vld [vmem:[#allocation2 + $0x70] sm:$0xff]
    %v164 = vld [vmem:[#allocation2 + $0x78] sm:$0xff]
    %v165 = vld [vmem:[%s4] sm:$0x1]
    %v167 = vlaneseq
    %v168 = vshrl.u32 %v167, 7
    %v169 = vsub.s32 0, %v168
    %v170 = vrot.slane %v165, %v169
    %172 = vmatprep.subr.mxu0 0.0
    %173 = vmatpush1.msra.mxu0 %v149
    %174 = vmatprep.subr.mxu0 0.0
    %175 = vmatpush1.msra.mxu0 %v150
    %176 = vmatprep.subr.mxu0 0.0
    %177 = vmatpush1.msra.mxu0 %v151
    %178 = vmatprep.subr.mxu0 0.0
    %179 = vmatpush1.msra.mxu0 %v152
    %180 = vmatprep.subr.mxu0 0.0
    %181 = vmatpush1.msra.mxu0 %v153
    %182 = vmatprep.subr.mxu0 0.0
    %183 = vmatpush1.msra.mxu0 %v154
    %184 = vmatprep.subr.mxu0 0.0
    %185 = vmatpush1.msra.mxu0 %v155
    %186 = vmatprep.subr.mxu0 0.0
    %187 = vmatpush1.msra.mxu0 %v156
    %188 = vmatprep.subr.mxu0 0.0
    %189 = vmatpush1.msra.mxu0 %v157
    %190 = vmatprep.subr.mxu0 0.0
    %191 = vmatpush1.msra.mxu0 %v158
    %192 = vmatprep.subr.mxu0 0.0
    %193 = vmatpush1.msra.mxu0 %v159
    %194 = vmatprep.subr.mxu0 0.0
    %195 = vmatpush1.msra.mxu0 %v160
    %196 = vmatprep.subr.mxu0 0.0
    %197 = vmatpush1.msra.mxu0 %v161
    %198 = vmatprep.subr.mxu0 0.0
    %199 = vmatpush1.msra.mxu0 %v162
    %200 = vmatprep.subr.mxu0 0.0
    %201 = vmatpush1.msra.mxu0 %v163
    %202 = vmatprep.subr.mxu0 0.0
    %203 = vmatpush1.msra.mxu0 %v164
    %204 = vmatprep.subr.mxu0 0.0
    %205 = vmatpush1.msra.mxu0 0.0
    %206 = vmatprep.subr.mxu0 0.0
    %207 = vmatpush1.msra.mxu0 0.0
    %208 = vmatprep.subr.mxu0 0.0
    %209 = vmatpush1.msra.mxu0 0.0
    %210 = vmatprep.subr.mxu0 0.0
    %211 = vmatpush1.msra.mxu0 0.0
    %212 = vmatprep.subr.mxu0 0.0
    %213 = vmatpush1.msra.mxu0 0.0
    %214 = vmatprep.subr.mxu0 0.0
    %215 = vmatpush1.msra.mxu0 0.0
    %216 = vmatprep.subr.mxu0 0.0
    %217 = vmatpush1.msra.mxu0 0.0
    %218 = vmatprep.subr.mxu0 0.0
    %219 = vmatpush1.msra.mxu0 0.0
    %220 = vmatprep.subr.mxu0 0.0
    %221 = vmatpush1.msra.mxu0 0.0
    %222 = vmatprep.subr.mxu0 0.0
    %223 = vmatpush1.msra.mxu0 0.0
    %224 = vmatprep.subr.mxu0 0.0
    %225 = vmatpush1.msra.mxu0 0.0
    %226 = vmatprep.subr.mxu0 0.0
    %227 = vmatpush1.msra.mxu0 0.0
    %228 = vmatprep.subr.mxu0 0.0
    %229 = vmatpush1.msra.mxu0 0.0
    %230 = vmatprep.subr.mxu0 0.0
    %231 = vmatpush1.msra.mxu0 0.0
    %232 = vmatprep.subr.mxu0 0.0
    %233 = vmatpush1.msra.mxu0 0.0
    %234 = vmatprep.subr.mxu0 0.0
    %235 = vmatpush1.msra.mxu0 0.0
    %236 = vmatprep.mubr.f32.mxu0 0.0
    %237 = vmatmul.mubr.f32.gmra.mrb[0].mxu0 %v148
    %v238 = vpop.f32.mrb[0].mxu0
    %v239 = vadd.f32 %v170, %v238
    %v240 = vpop.f32.mrb[0].mxu0
    %241 = vdwg.mxu0
    %v242 = vxor.u32 %v239, 2147483648
    %v243 = vmul.f32 %v242, 1.442695
    %v244 = vpow.pop %v243
    %v245 = vadd.f32 %v244, 1.0
    %v246 = vrcp.pop %v245
    %v247 = vmul.f32 1.0, %v246
    %v248 = vmul.f32 %v239, %v247
    %v249 = vld [vmem:[#allocation5] sm:$0xff]
    %v250 = vld [vmem:[#allocation5 + $0x8] sm:$0xff]
    %v251 = vld [vmem:[#allocation5 + $0x10] sm:$0xff]
    %v252 = vld [vmem:[#allocation5 + $0x18] sm:$0xff]
    %v253 = vld [vmem:[#allocation5 + $0x20] sm:$0xff]
    %v254 = vld [vmem:[#allocation5 + $0x28] sm:$0xff]
    %v255 = vld [vmem:[#allocation5 + $0x30] sm:$0xff]
    %v256 = vld [vmem:[#allocation5 + $0x38] sm:$0xff]
    %v257 = vld [vmem:[#allocation5 + $0x40] sm:$0xff]
    %v258 = vld [vmem:[#allocation5 + $0x48] sm:$0xff]
    %v259 = vld [vmem:[#allocation5 + $0x50] sm:$0xff]
    %v260 = vld [vmem:[#allocation5 + $0x58] sm:$0xff]
    %v261 = vld [vmem:[#allocation5 + $0x60] sm:$0xff]
    %v262 = vld [vmem:[#allocation5 + $0x68] sm:$0xff]
    %v263 = vld [vmem:[#allocation5 + $0x70] sm:$0xff]
    %v264 = vld [vmem:[#allocation5 + $0x78] sm:$0xff]
    %v265 = vld [vmem:[%s6] sm:$0xff]
    %266 = vmatprep.subr.mxu0 0.0
    %267 = vmatpush1.msra.mxu0 %v249
    %268 = vmatprep.subr.mxu0 0.0
    %269 = vmatpush1.msra.mxu0 %v250
    %270 = vmatprep.subr.mxu0 0.0
    %271 = vmatpush1.msra.mxu0 %v251
    %272 = vmatprep.subr.mxu0 0.0
    %273 = vmatpush1.msra.mxu0 %v252
    %274 = vmatprep.subr.mxu0 0.0
    %275 = vmatpush1.msra.mxu0 %v253
    %276 = vmatprep.subr.mxu0 0.0
    %277 = vmatpush1.msra.mxu0 %v254
    %278 = vmatprep.subr.mxu0 0.0
    %279 = vmatpush1.msra.mxu0 %v255
    %280 = vmatprep.subr.mxu0 0.0
    %281 = vmatpush1.msra.mxu0 %v256
    %282 = vmatprep.subr.mxu0 0.0
    %283 = vmatpush1.msra.mxu0 %v257
    %284 = vmatprep.subr.mxu0 0.0
    %285 = vmatpush1.msra.mxu0 %v258
    %286 = vmatprep.subr.mxu0 0.0
    %287 = vmatpush1.msra.mxu0 %v259
    %288 = vmatprep.subr.mxu0 0.0
    %289 = vmatpush1.msra.mxu0 %v260
    %290 = vmatprep.subr.mxu0 0.0
    %291 = vmatpush1.msra.mxu0 %v261
    %292 = vmatprep.subr.mxu0 0.0
    %293 = vmatpush1.msra.mxu0 %v262
    %294 = vmatprep.subr.mxu0 0.0
    %295 = vmatpush1.msra.mxu0 %v263
    %296 = vmatprep.subr.mxu0 0.0
    %297 = vmatpush1.msra.mxu0 %v264
    %298 = vmatprep.subr.mxu0 0.0
    %299 = vmatpush1.msra.mxu0 0.0
    %300 = vmatprep.subr.mxu0 0.0
    %301 = vmatpush1.msra.mxu0 0.0
    %302 = vmatprep.subr.mxu0 0.0
    %303 = vmatpush1.msra.mxu0 0.0
    %304 = vmatprep.subr.mxu0 0.0
    %305 = vmatpush1.msra.mxu0 0.0
    %306 = vmatprep.subr.mxu0 0.0
    %307 = vmatpush1.msra.mxu0 0.0
    %308 = vmatprep.subr.mxu0 0.0
    %309 = vmatpush1.msra.mxu0 0.0
    %310 = vmatprep.subr.mxu0 0.0
    %311 = vmatpush1.msra.mxu0 0.0
    %312 = vmatprep.subr.mxu0 0.0
    %313 = vmatpush1.msra.mxu0 0.0
    %314 = vmatprep.subr.mxu0 0.0
    %315 = vmatpush1.msra.mxu0 0.0
    %316 = vmatprep.subr.mxu0 0.0
    %317 = vmatpush1.msra.mxu0 0.0
    %318 = vmatprep.subr.mxu0 0.0
    %319 = vmatpush1.msra.mxu0 0.0
    %320 = vmatprep.subr.mxu0 0.0
    %321 = vmatpush1.msra.mxu0 0.0
    %322 = vmatprep.subr.mxu0 0.0
    %323 = vmatpush1.msra.mxu0 0.0
    %324 = vmatprep.subr.mxu0 0.0
    %325 = vmatpush1.msra.mxu0 0.0
    %326 = vmatprep.subr.mxu0 0.0
    %327 = vmatpush1.msra.mxu0 0.0
    %328 = vmatprep.subr.mxu0 0.0
    %329 = vmatpush1.msra.mxu0 0.0
    %330 = vmatprep.mubr.f32.mxu0 0.0
    %331 = vmatmul.mubr.f32.gmra.mrb[0].mxu0 %v248
    %v332 = vpop.f32.mrb[0].mxu0
    %v333 = vadd.f32 %v265, %v332
    %v334 = vpop.f32.mrb[0].mxu0
    %335 = vdwg.mxu0
    %336 = vst [vmem:[#allocation7] sm:$0xff] %v333
    // Predicated region
    $region38: #{tpu_custom_call.1} parent=1 // pred_check
      _
    $region39: #{tpu_custom_call.1} parent=1 // pred_check_branch
      %338 = sbr.rel (0) target = $region41
    $region40: #{tpu_custom_call.1} parent=1 // pred_region
      %s340 = ssub.s32 128, 128
      %341 = vsyncadd [#allocation4], %s340
      %s343 = sshll.u32 [#allocation7], 4
      %s344 = int_to_ptr.vmem [resolvable:$true] %s343
      %346 = dma.vmem_to_hbm [thread:$0]  %s344, 128, %s7, [#allocation4]
    $region41: #{tpu_custom_call.1} parent=1 // pred_fallthru
      _
    // Predicated region
    $region42: #{tpu_custom_call.1} parent=1 // pred_check
      _
    $region43: #{tpu_custom_call.1} parent=1 // pred_check_branch
      %348 = sbr.rel (0) target = $region45
    $region44: #{tpu_custom_call.1} parent=1 // pred_region
      %349 = dma.done [#allocation4], 128
    $region45: #{tpu_custom_call.1} parent=1 // pred_fallthru
      _
    %350 = vsyncpa [#allocation3], 1
    %351 = vsyncpa [#allocation6], 1
    %352 = vsyncpa [#allocation4], 1

</llo_original>
